<compile_context>
chip_gen: v5e
topology: v5e:2x2
jax: 0.10.0
libtpu: 0.0.40
codegen_flags: <defaults>
</compile_context>

<pallas_src>
import functools
import math

import numpy as np
import jax
import jax.numpy as jnp
from jax import lax
from jax.experimental import pallas as pl
from jax.experimental.pallas import tpu as pltpu


# ----------------------------- Pallas kernel --------------------------------


def _ghost_bottleneck_kernel(x_ref, masks_ref,
                             wp1_ref, bp1_ref, wd1_ref, bd1_ref,
                             wp2a_ref, wp2b_ref, bp2_ref, wd2_ref, bd2_ref,
                             out_ref, *, W):
  """One grid step = one image: (C, H*W) slab, channels on sublanes, H*W on lanes."""
  Cin, L = x_ref.shape
  M1 = wp1_ref.shape[0]          # ghost1 primary channels
  Mb = wd1_ref.shape[1]          # ghost1 cheap channels actually kept (= mid - M1)
  C1 = bp2_ref.shape[0]          # ghost2 primary channels
  Cb = wd2_ref.shape[1]          # ghost2 cheap channels actually kept (= out - C1)

  x = x_ref[...]                                   # (Cin, L) f32

  # Precomputed edge masks, one (1, L) row each.
  nfc = masks_ref[0]             # not first column
  nlc = masks_ref[1]             # not last column
  nfr = masks_ref[2]             # not first row
  nlr = masks_ref[3]             # not last row

  def dw3x3(v, w_ref):
    """Depthwise 3x3, pad=1, stride=1. v: (C, L); w_ref: (9, C, 1), k = 3*ky + kx."""
    # Column-edge masks applied once per dx on the *source* (pre-roll).
    src = {-1: v * nlc, 0: v, 1: v * nfc}

    def row_taps(dy):
      acc = None
      for dx in (-1, 0, 1):
        k = 3 * (dy + 1) + (dx + 1)
        # Want tap[p] = src[p + dy*W + dx]; np.roll convention roll(v,s)[i] = v[i-s].
        shift = (-(dy * W + dx)) % L
        tap = src[dx] if shift == 0 else pltpu.roll(src[dx], shift, axis=1)
        term = w_ref[k] * tap                      # (C,1) * (C,L) lane-broadcast
        acc = term if acc is None else acc + term
      return acc

    # Row-edge masks applied once per dy group (post-roll), not per tap.
    out = row_taps(0)
    out = out + nfr * row_taps(-1)
    out = out + nlr * row_taps(1)
    return out

  # ---- ghost1 primary: 1x1 conv (BN scale folded) + bias + ReLU  (MXU, bf16) ----
  x1 = jnp.maximum(
      jnp.dot(wp1_ref[...], x.astype(jnp.bfloat16),
              preferred_element_type=jnp.float32) + bp1_ref[...],
      0.0)                                                        # (M1, L)

  # ---- ghost1 cheap: depthwise 3x3 + bias + ReLU (only the Mb channels kept) ----
  x1b = x1 if Mb == M1 else x1[:Mb]
  x2 = jnp.maximum(dw3x3(x1b, wd1_ref) + bd1_ref[...], 0.0)       # (Mb, L)

  # ---- ghost2 primary: two unpadded MXU matmuls, no concat ----
  y1 = (jnp.dot(wp2a_ref[...], x1.astype(jnp.bfloat16),
                preferred_element_type=jnp.float32)
        + jnp.dot(wp2b_ref[...], x2.astype(jnp.bfloat16),
                  preferred_element_type=jnp.float32)
        + bp2_ref[...])                                           # (C1, L)

  # ---- ghost2 cheap: depthwise 3x3 + bias (no activation), Cb channels only ----
  y1b = y1 if Cb == C1 else y1[:Cb]
  y2 = dw3x3(y1b, wd2_ref) + bd2_ref[...]                         # (Cb, L)

  # ---- out = concat([y1, y2], channel) + identity shortcut ----
  if C1 % 8 == 0:
    # Sublane-aligned split: two direct dense stores, no concat copy.
    out_ref[0:C1, :] = (y1 + x[0:C1]).astype(out_ref.dtype)
    out_ref[C1:, :] = (y2 + x[C1:]).astype(out_ref.dtype)
  else:
    # Unaligned split (e.g. C1=4 in the demo): single dense store via one small concat.
    out_ref[...] = (jnp.concatenate([y1, y2], axis=0) + x).astype(out_ref.dtype)


# ------------------------------- wrapper -------------------------------------


def ghost_bottleneck_pallas(x_nchw, params):
  N, Cin, H, W = x_nchw.shape
  HW = H * W

  wp1, bp1, wd1, bd1 = params['wp1'], params['bp1'], params['wd1'], params['bd1']
  wp2a, wp2b, bp2 = params['wp2a'], params['wp2b'], params['bp2']
  wd2, bd2 = params['wd2'], params['bd2']

  M1, Mb = wp1.shape[0], wd1.shape[1]
  C1, Cb = bp2.shape[0], wd2.shape[1]
  Cout = C1 + Cb
  assert Cin == Cout, "identity-shortcut config (in_channels == out_channels, stride=1)"

  # Free (contiguous) reshape: NCHW -> (N, C, H*W). No HBM relayout on either side.
  x3 = x_nchw.reshape(N, Cin, HW)

  # Precomputed column/row edge masks, shared across all grid steps.
  col = np.arange(HW) % W
  row = np.arange(HW) // W
  masks = jnp.asarray(
      np.stack([col != 0, col != W - 1, row != 0, row != H - 1])
      .astype(np.float32)[:, None, :])                            # (4, 1, HW)

  kernel = functools.partial(_ghost_bottleneck_kernel, W=W)
  weight_args = (wp1, bp1, wd1, bd1, wp2a, wp2b, bp2, wd2, bd2)

  def _const(a):
    return pl.BlockSpec(a.shape, lambda b: (0,) * a.ndim)

  in_specs = [pl.BlockSpec((None, Cin, HW), lambda b: (b, 0, 0)),  # one image per step
              _const(masks)]
  in_specs += [_const(a) for a in weight_args]
  out_spec = pl.BlockSpec((None, Cout, HW), lambda b: (b, 0, 0))

  flops = N * HW * (2 * M1 * Cin                 # ghost1 primary
                    + 2 * C1 * (M1 + Mb)         # ghost2 primary
                    + 22 * (Mb + Cb)             # depthwise taps + masks + bias/ReLU
                    + 2 * Cout)                  # shortcut add
  bytes_accessed = (4 * N * HW * (Cin + Cout) + 4 * masks.size
                    + sum(int(np.prod(a.shape)) * a.dtype.itemsize for a in weight_args))

  out = pl.pallas_call(
      kernel,
      out_shape=jax.ShapeDtypeStruct((N, Cout, HW), x_nchw.dtype),
      grid_spec=pltpu.PrefetchScalarGridSpec(
          num_scalar_prefetch=0,
          grid=(N,),
          in_specs=in_specs,
          out_specs=out_spec),
      compiler_params=pltpu.CompilerParams(
          dimension_semantics=("parallel",)),
      cost_estimate=pl.CostEstimate(
          flops=int(flops), transcendentals=0, bytes_accessed=int(bytes_accessed)),
  )(x3, masks, *weight_args)

  return out.reshape(N, Cout, H, W)


# --------------------- parameter init & BN folding (glue) --------------------


def init_params(key, in_c, mid_c, out_c):
  """Deterministic synthetic parameters matching the PyTorch module's shapes."""
  m1 = math.ceil(mid_c / 2)        # ghost1 init channels (ratio=2)
  c1 = math.ceil(out_c / 2)        # ghost2 init channels
  ks = jax.random.split(key, 8)

  def bn(k, c):                    # (gamma, beta, running_mean, running_var)
    k1, k2, k3, k4 = jax.random.split(k, 4)
    return (1.0 + 0.1 * jax.random.normal(k1, (c,), jnp.float32),
            0.1 * jax.random.normal(k2, (c,), jnp.float32),
            0.1 * jax.random.normal(k3, (c,), jnp.float32),
            jax.random.uniform(k4, (c,), jnp.float32, 0.5, 1.5))

  return dict(
      wp1=0.3 * jax.random.normal(ks[0], (m1, in_c), jnp.float32),    # (O, I) 1x1 conv
      bn_p1=bn(ks[1], m1),
      wd1=0.3 * jax.random.normal(ks[2], (m1, 3, 3), jnp.float32),    # depthwise (C,3,3)
      bn_d1=bn(ks[3], m1),
      wp2=0.3 * jax.random.normal(ks[4], (c1, mid_c), jnp.float32),
      bn_p2=bn(ks[5], c1),
      wd2=0.3 * jax.random.normal(ks[6], (c1, 3, 3), jnp.float32),
      bn_d2=bn(ks[7], c1),
  )


def fold_params(raw, mid_c, out_c, eps=1e-5, mxu_dtype=jnp.bfloat16):
  """Fold eval-mode BN scales into conv weights; reshape for the kernel layout."""
  def scale_bias(bn):
    g, b, m, v = bn
    s = g / jnp.sqrt(v + eps)
    return s, b - m * s

  M1 = raw['wp1'].shape[0]
  C1 = raw['wp2'].shape[0]
  Mb = mid_c - M1                 # ghost1 cheap channels actually kept
  Cb = out_c - C1                 # ghost2 cheap channels actually kept

  s1, b1 = scale_bias(raw['bn_p1'])
  wp1 = (raw['wp1'] * s1[:, None]).astype(mxu_dtype)              # (M1, Cin) bf16
  bp1 = b1[:, None]                                               # (M1, 1)  f32

  sd1, bd1v = scale_bias(raw['bn_d1'])
  wd1_full = (raw['wd1'] * sd1[:, None, None]).reshape(M1, 9)     # taps k = 3*ky + kx
  wd1 = jnp.transpose(wd1_full[:Mb], (1, 0))[:, :, None]          # (9, Mb, 1)
  bd1 = bd1v[:Mb, None]                                           # (Mb, 1)

  s2, b2 = scale_bias(raw['bn_p2'])
  wp2 = raw['wp2'] * s2[:, None]                                  # (C1, mid_c)
  wp2a = wp2[:, :M1].astype(mxu_dtype)                            # (C1, M1) bf16
  wp2b = wp2[:, M1:mid_c].astype(mxu_dtype)                       # (C1, Mb) bf16
  bp2 = b2[:, None]                                               # (C1, 1)

  sd2, bd2v = scale_bias(raw['bn_d2'])
  wd2_full = (raw['wd2'] * sd2[:, None, None]).reshape(C1, 9)
  wd2 = jnp.transpose(wd2_full[:Cb], (1, 0))[:, :, None]          # (9, Cb, 1)
  bd2 = bd2v[:Cb, None]                                           # (Cb, 1)

  return dict(wp1=wp1, bp1=bp1, wd1=wd1, bd1=bd1,
              wp2a=wp2a, wp2b=wp2b, bp2=bp2, wd2=wd2, bd2=bd2)


# ----------------------------- pure-JAX reference ----------------------------


def _bn(x, g, b, m, v, eps=1e-5):
  return (x - m) / jnp.sqrt(v + eps) * g + b


def _conv1x1(x, w_oi):
  return jnp.einsum('nhwi,oi->nhwo', x, w_oi)


def _dwconv3(x, w_c33):
  C = x.shape[-1]
  k = jnp.transpose(w_c33, (1, 2, 0))[:, :, None, :]              # HWIO (3,3,1,C)
  return lax.conv_general_dilated(
      x, k, window_strides=(1, 1), padding=((1, 1), (1, 1)),
      dimension_numbers=('NHWC', 'HWIO', 'NHWC'), feature_group_count=C)


def _ghost_module_ref(x, out_channels, wp, bn_p, wd, bn_d, is_act):
  x1 = _bn(_conv1x1(x, wp), *bn_p)
  if is_act:
    x1 = jnp.maximum(x1, 0.0)
  x2 = _bn(_dwconv3(x1, wd), *bn_d)
  if is_act:
    x2 = jnp.maximum(x2, 0.0)
  return jnp.concatenate([x1, x2], axis=-1)[..., :out_channels]


def ghost_bottleneck_ref(x_nchw, raw, mid_c, out_c):
  x = jnp.transpose(x_nchw, (0, 2, 3, 1))
  mid = _ghost_module_ref(x, mid_c, raw['wp1'], raw['bn_p1'],
                          raw['wd1'], raw['bn_d1'], True)
  y = _ghost_module_ref(mid, out_c, raw['wp2'], raw['bn_p2'],
                        raw['wd2'], raw['bn_d2'], False)
  y = y + x                                                       # identity shortcut
  return jnp.transpose(y, (0, 3, 1, 2))


# ---------------------------------- main --------------------------------------


if __name__ == "__main__":
  N, Cin, H, W = 2, 8, 16, 16
  mid_channels, out_channels = 16, 8    # in==out & stride==1 -> identity shortcut

  key = jax.random.PRNGKey(0)
  kx, kp = jax.random.split(key)
  x = jax.random.normal(kx, (N, Cin, H, W), jnp.float32)

  raw = init_params(kp, Cin, mid_channels, out_channels)
  params = fold_params(raw, mid_channels, out_channels)

  out = jax.jit(ghost_bottleneck_pallas)(x, params)
  out = jax.block_until_ready(out)

  ref = ghost_bottleneck_ref(x, raw, mid_channels, out_channels)
  # bf16 MXU operands (f32 accumulation) -> looser tolerance than the pure-f32 path.
  np.testing.assert_allclose(np.asarray(out), np.asarray(ref), rtol=5e-2, atol=5e-2)
  print("KERNEL_OK")
</pallas_src>

<mosaic_0001>
module attributes {stable_mosaic.version = 11 : i64} {
  func.func @_ghost_bottleneck_kernel(%arg0: i32, %arg1: memref<1x8x256xf32, #tpu.memory_space<vmem>>, %arg2: memref<4x1x256xf32, #tpu.memory_space<vmem>>, %arg3: memref<8x8xbf16, #tpu.memory_space<vmem>>, %arg4: memref<8x1xf32, #tpu.memory_space<vmem>>, %arg5: memref<9x8x1xf32, #tpu.memory_space<vmem>>, %arg6: memref<8x1xf32, #tpu.memory_space<vmem>>, %arg7: memref<4x8xbf16, #tpu.memory_space<vmem>>, %arg8: memref<4x8xbf16, #tpu.memory_space<vmem>>, %arg9: memref<4x1xf32, #tpu.memory_space<vmem>>, %arg10: memref<9x4x1xf32, #tpu.memory_space<vmem>>, %arg11: memref<4x1xf32, #tpu.memory_space<vmem>>, %arg12: memref<1x8x256xf32, #tpu.memory_space<vmem>>) attributes {dimension_semantics = [#tpu.dimension_semantics<parallel>], iteration_bounds = array<i64: 2>, scalar_prefetch = 0 : i64, scratch_operands = 0 : i64, tpu.core_type = #tpu.core_type<tc>, window_params = [{transform_indices = @transform_0, window_bounds = array<i64: 1, 8, 256>}, {pipeline_mode = #tpu.pipeline_mode<synchronous>, transform_indices = @transform_1, window_bounds = array<i64: 4, 1, 256>}, {pipeline_mode = #tpu.pipeline_mode<synchronous>, transform_indices = @transform_2, window_bounds = array<i64: 8, 8>}, {pipeline_mode = #tpu.pipeline_mode<synchronous>, transform_indices = @transform_3, window_bounds = array<i64: 8, 1>}, {pipeline_mode = #tpu.pipeline_mode<synchronous>, transform_indices = @transform_4, window_bounds = array<i64: 9, 8, 1>}, {pipeline_mode = #tpu.pipeline_mode<synchronous>, transform_indices = @transform_5, window_bounds = array<i64: 8, 1>}, {pipeline_mode = #tpu.pipeline_mode<synchronous>, transform_indices = @transform_6, window_bounds = array<i64: 4, 8>}, {pipeline_mode = #tpu.pipeline_mode<synchronous>, transform_indices = @transform_7, window_bounds = array<i64: 4, 8>}, {pipeline_mode = #tpu.pipeline_mode<synchronous>, transform_indices = @transform_8, window_bounds = array<i64: 4, 1>}, {pipeline_mode = #tpu.pipeline_mode<synchronous>, transform_indices = @transform_9, window_bounds = array<i64: 9, 4, 1>}, {pipeline_mode = #tpu.pipeline_mode<synchronous>, transform_indices = @transform_10, window_bounds = array<i64: 4, 1>}, {transform_indices = @transform_11, window_bounds = array<i64: 1, 8, 256>}]} {
    %c0 = arith.constant 0 : index
    %c0_0 = arith.constant 0 : index
    %c0_1 = arith.constant 0 : index
    %0 = vector.load %arg1[%c0, %c0_0, %c0_1] : memref<1x8x256xf32, #tpu.memory_space<vmem>>, vector<1x8x256xf32>
    %1 = vector.shape_cast %0 : vector<1x8x256xf32> to vector<8x256xf32>
    %c0_2 = arith.constant 0 : index
    %c0_3 = arith.constant 0 : index
    %c0_4 = arith.constant 0 : index
    %2 = vector.load %arg2[%c0_2, %c0_3, %c0_4] : memref<4x1x256xf32, #tpu.memory_space<vmem>>, vector<1x1x256xf32>
    %3 = vector.shape_cast %2 : vector<1x1x256xf32> to vector<1x256xf32>
    %c1 = arith.constant 1 : index
    %c0_5 = arith.constant 0 : index
    %c0_6 = arith.constant 0 : index
    %4 = vector.load %arg2[%c1, %c0_5, %c0_6] : memref<4x1x256xf32, #tpu.memory_space<vmem>>, vector<1x1x256xf32>
    %5 = vector.shape_cast %4 : vector<1x1x256xf32> to vector<1x256xf32>
    %c2 = arith.constant 2 : index
    %c0_7 = arith.constant 0 : index
    %c0_8 = arith.constant 0 : index
    %6 = vector.load %arg2[%c2, %c0_7, %c0_8] : memref<4x1x256xf32, #tpu.memory_space<vmem>>, vector<1x1x256xf32>
    %7 = vector.shape_cast %6 : vector<1x1x256xf32> to vector<1x256xf32>
    %c3 = arith.constant 3 : index
    %c0_9 = arith.constant 0 : index
    %c0_10 = arith.constant 0 : index
    %8 = vector.load %arg2[%c3, %c0_9, %c0_10] : memref<4x1x256xf32, #tpu.memory_space<vmem>>, vector<1x1x256xf32>
    %9 = vector.shape_cast %8 : vector<1x1x256xf32> to vector<1x256xf32>
    %c0_11 = arith.constant 0 : index
    %c0_12 = arith.constant 0 : index
    %10 = vector.load %arg3[%c0_11, %c0_12] : memref<8x8xbf16, #tpu.memory_space<vmem>>, vector<8x8xbf16>
    %11 = arith.truncf %1 : vector<8x256xf32> to vector<8x256xbf16>
    %cst = arith.constant dense<0.000000e+00> : vector<8x256xf32>
    %12 = tpu.matmul %10, %11, %cst {dimension_numbers = #tpu.dot_dimension_numbers<[1], [0], [0], [1], [0, 0, 1, 1], [], []>} : vector<8x8xbf16>, vector<8x256xbf16>, vector<8x256xf32> -> vector<8x256xf32>
    %c0_13 = arith.constant 0 : index
    %c0_14 = arith.constant 0 : index
    %13 = vector.load %arg4[%c0_13, %c0_14] : memref<8x1xf32, #tpu.memory_space<vmem>>, vector<8x1xf32>
    %14 = vector.broadcast %13 : vector<8x1xf32> to vector<8x256xf32>
    %15 = arith.addf %12, %14 : vector<8x256xf32>
    %cst_15 = arith.constant 0.000000e+00 : f32
    %16 = vector.broadcast %cst_15 : f32 to vector<8x256xf32>
    %17 = arith.maximumf %15, %16 : vector<8x256xf32>
    %18 = vector.broadcast %5 : vector<1x256xf32> to vector<8x256xf32>
    %19 = arith.mulf %17, %18 : vector<8x256xf32>
    %20 = vector.broadcast %3 : vector<1x256xf32> to vector<8x256xf32>
    %21 = arith.mulf %17, %20 : vector<8x256xf32>
    %c1_i32 = arith.constant 1 : i32
    %22 = tpu.dynamic_rotate %19 by %c1_i32 dim 1 : vector<8x256xf32>, i32 -> vector<8x256xf32>
    %c3_16 = arith.constant 3 : index
    %c0_17 = arith.constant 0 : index
    %c0_18 = arith.constant 0 : index
    %23 = vector.load %arg5[%c3_16, %c0_17, %c0_18] : memref<9x8x1xf32, #tpu.memory_space<vmem>>, vector<1x8x1xf32>
    %24 = vector.shape_cast %23 : vector<1x8x1xf32> to vector<8x1xf32>
    %25 = vector.broadcast %24 : vector<8x1xf32> to vector<8x256xf32>
    %26 = arith.mulf %25, %22 : vector<8x256xf32>
    %c4 = arith.constant 4 : index
    %c0_19 = arith.constant 0 : index
    %c0_20 = arith.constant 0 : index
    %27 = vector.load %arg5[%c4, %c0_19, %c0_20] : memref<9x8x1xf32, #tpu.memory_space<vmem>>, vector<1x8x1xf32>
    %28 = vector.shape_cast %27 : vector<1x8x1xf32> to vector<8x1xf32>
    %29 = vector.broadcast %28 : vector<8x1xf32> to vector<8x256xf32>
    %30 = arith.mulf %29, %17 : vector<8x256xf32>
    %31 = arith.addf %26, %30 : vector<8x256xf32>
    %c255_i32 = arith.constant 255 : i32
    %32 = tpu.dynamic_rotate %21 by %c255_i32 dim 1 : vector<8x256xf32>, i32 -> vector<8x256xf32>
    %c5 = arith.constant 5 : index
    %c0_21 = arith.constant 0 : index
    %c0_22 = arith.constant 0 : index
    %33 = vector.load %arg5[%c5, %c0_21, %c0_22] : memref<9x8x1xf32, #tpu.memory_space<vmem>>, vector<1x8x1xf32>
    %34 = vector.shape_cast %33 : vector<1x8x1xf32> to vector<8x1xf32>
    %35 = vector.broadcast %34 : vector<8x1xf32> to vector<8x256xf32>
    %36 = arith.mulf %35, %32 : vector<8x256xf32>
    %37 = arith.addf %31, %36 : vector<8x256xf32>
    %c17_i32 = arith.constant 17 : i32
    %38 = tpu.dynamic_rotate %19 by %c17_i32 dim 1 : vector<8x256xf32>, i32 -> vector<8x256xf32>
    %c0_23 = arith.constant 0 : index
    %c0_24 = arith.constant 0 : index
    %c0_25 = arith.constant 0 : index
    %39 = vector.load %arg5[%c0_23, %c0_24, %c0_25] : memref<9x8x1xf32, #tpu.memory_space<vmem>>, vector<1x8x1xf32>
    %40 = vector.shape_cast %39 : vector<1x8x1xf32> to vector<8x1xf32>
    %41 = vector.broadcast %40 : vector<8x1xf32> to vector<8x256xf32>
    %42 = arith.mulf %41, %38 : vector<8x256xf32>
    %c16_i32 = arith.constant 16 : i32
    %43 = tpu.dynamic_rotate %17 by %c16_i32 dim 1 : vector<8x256xf32>, i32 -> vector<8x256xf32>
    %c1_26 = arith.constant 1 : index
    %c0_27 = arith.constant 0 : index
    %c0_28 = arith.constant 0 : index
    %44 = vector.load %arg5[%c1_26, %c0_27, %c0_28] : memref<9x8x1xf32, #tpu.memory_space<vmem>>, vector<1x8x1xf32>
    %45 = vector.shape_cast %44 : vector<1x8x1xf32> to vector<8x1xf32>
    %46 = vector.broadcast %45 : vector<8x1xf32> to vector<8x256xf32>
    %47 = arith.mulf %46, %43 : vector<8x256xf32>
    %48 = arith.addf %42, %47 : vector<8x256xf32>
    %c15_i32 = arith.constant 15 : i32
    %49 = tpu.dynamic_rotate %21 by %c15_i32 dim 1 : vector<8x256xf32>, i32 -> vector<8x256xf32>
    %c2_29 = arith.constant 2 : index
    %c0_30 = arith.constant 0 : index
    %c0_31 = arith.constant 0 : index
    %50 = vector.load %arg5[%c2_29, %c0_30, %c0_31] : memref<9x8x1xf32, #tpu.memory_space<vmem>>, vector<1x8x1xf32>
    %51 = vector.shape_cast %50 : vector<1x8x1xf32> to vector<8x1xf32>
    %52 = vector.broadcast %51 : vector<8x1xf32> to vector<8x256xf32>
    %53 = arith.mulf %52, %49 : vector<8x256xf32>
    %54 = arith.addf %48, %53 : vector<8x256xf32>
    %55 = vector.broadcast %7 : vector<1x256xf32> to vector<8x256xf32>
    %56 = arith.mulf %55, %54 : vector<8x256xf32>
    %57 = arith.addf %37, %56 : vector<8x256xf32>
    %c241_i32 = arith.constant 241 : i32
    %58 = tpu.dynamic_rotate %19 by %c241_i32 dim 1 : vector<8x256xf32>, i32 -> vector<8x256xf32>
    %c6 = arith.constant 6 : index
    %c0_32 = arith.constant 0 : index
    %c0_33 = arith.constant 0 : index
    %59 = vector.load %arg5[%c6, %c0_32, %c0_33] : memref<9x8x1xf32, #tpu.memory_space<vmem>>, vector<1x8x1xf32>
    %60 = vector.shape_cast %59 : vector<1x8x1xf32> to vector<8x1xf32>
    %61 = vector.broadcast %60 : vector<8x1xf32> to vector<8x256xf32>
    %62 = arith.mulf %61, %58 : vector<8x256xf32>
    %c240_i32 = arith.constant 240 : i32
    %63 = tpu.dynamic_rotate %17 by %c240_i32 dim 1 : vector<8x256xf32>, i32 -> vector<8x256xf32>
    %c7 = arith.constant 7 : index
    %c0_34 = arith.constant 0 : index
    %c0_35 = arith.constant 0 : index
    %64 = vector.load %arg5[%c7, %c0_34, %c0_35] : memref<9x8x1xf32, #tpu.memory_space<vmem>>, vector<1x8x1xf32>
    %65 = vector.shape_cast %64 : vector<1x8x1xf32> to vector<8x1xf32>
    %66 = vector.broadcast %65 : vector<8x1xf32> to vector<8x256xf32>
    %67 = arith.mulf %66, %63 : vector<8x256xf32>
    %68 = arith.addf %62, %67 : vector<8x256xf32>
    %c239_i32 = arith.constant 239 : i32
    %69 = tpu.dynamic_rotate %21 by %c239_i32 dim 1 : vector<8x256xf32>, i32 -> vector<8x256xf32>
    %c8 = arith.constant 8 : index
    %c0_36 = arith.constant 0 : index
    %c0_37 = arith.constant 0 : index
    %70 = vector.load %arg5[%c8, %c0_36, %c0_37] : memref<9x8x1xf32, #tpu.memory_space<vmem>>, vector<1x8x1xf32>
    %71 = vector.shape_cast %70 : vector<1x8x1xf32> to vector<8x1xf32>
    %72 = vector.broadcast %71 : vector<8x1xf32> to vector<8x256xf32>
    %73 = arith.mulf %72, %69 : vector<8x256xf32>
    %74 = arith.addf %68, %73 : vector<8x256xf32>
    %75 = vector.broadcast %9 : vector<1x256xf32> to vector<8x256xf32>
    %76 = arith.mulf %75, %74 : vector<8x256xf32>
    %77 = arith.addf %57, %76 : vector<8x256xf32>
    %c0_38 = arith.constant 0 : index
    %c0_39 = arith.constant 0 : index
    %78 = vector.load %arg6[%c0_38, %c0_39] : memref<8x1xf32, #tpu.memory_space<vmem>>, vector<8x1xf32>
    %79 = vector.broadcast %78 : vector<8x1xf32> to vector<8x256xf32>
    %80 = arith.addf %77, %79 : vector<8x256xf32>
    %cst_40 = arith.constant 0.000000e+00 : f32
    %81 = vector.broadcast %cst_40 : f32 to vector<8x256xf32>
    %82 = arith.maximumf %80, %81 : vector<8x256xf32>
    %c0_41 = arith.constant 0 : index
    %c0_42 = arith.constant 0 : index
    %83 = vector.load %arg7[%c0_41, %c0_42] : memref<4x8xbf16, #tpu.memory_space<vmem>>, vector<4x8xbf16>
    %84 = arith.truncf %17 : vector<8x256xf32> to vector<8x256xbf16>
    %cst_43 = arith.constant dense<0.000000e+00> : vector<4x256xf32>
    %85 = tpu.matmul %83, %84, %cst_43 {dimension_numbers = #tpu.dot_dimension_numbers<[1], [0], [0], [1], [0, 0, 1, 1], [], []>} : vector<4x8xbf16>, vector<8x256xbf16>, vector<4x256xf32> -> vector<4x256xf32>
    %c0_44 = arith.constant 0 : index
    %c0_45 = arith.constant 0 : index
    %86 = vector.load %arg8[%c0_44, %c0_45] : memref<4x8xbf16, #tpu.memory_space<vmem>>, vector<4x8xbf16>
    %87 = arith.truncf %82 : vector<8x256xf32> to vector<8x256xbf16>
    %cst_46 = arith.constant dense<0.000000e+00> : vector<4x256xf32>
    %88 = tpu.matmul %86, %87, %cst_46 {dimension_numbers = #tpu.dot_dimension_numbers<[1], [0], [0], [1], [0, 0, 1, 1], [], []>} : vector<4x8xbf16>, vector<8x256xbf16>, vector<4x256xf32> -> vector<4x256xf32>
    %89 = arith.addf %85, %88 : vector<4x256xf32>
    %c0_47 = arith.constant 0 : index
    %c0_48 = arith.constant 0 : index
    %90 = vector.load %arg9[%c0_47, %c0_48] : memref<4x1xf32, #tpu.memory_space<vmem>>, vector<4x1xf32>
    %91 = vector.broadcast %90 : vector<4x1xf32> to vector<4x256xf32>
    %92 = arith.addf %89, %91 : vector<4x256xf32>
    %93 = vector.broadcast %5 : vector<1x256xf32> to vector<4x256xf32>
    %94 = arith.mulf %92, %93 : vector<4x256xf32>
    %95 = vector.broadcast %3 : vector<1x256xf32> to vector<4x256xf32>
    %96 = arith.mulf %92, %95 : vector<4x256xf32>
    %c1_i32_49 = arith.constant 1 : i32
    %97 = tpu.dynamic_rotate %94 by %c1_i32_49 dim 1 : vector<4x256xf32>, i32 -> vector<4x256xf32>
    %c3_50 = arith.constant 3 : index
    %c0_51 = arith.constant 0 : index
    %c0_52 = arith.constant 0 : index
    %98 = vector.load %arg10[%c3_50, %c0_51, %c0_52] : memref<9x4x1xf32, #tpu.memory_space<vmem>>, vector<1x4x1xf32>
    %99 = vector.shape_cast %98 : vector<1x4x1xf32> to vector<4x1xf32>
    %100 = vector.broadcast %99 : vector<4x1xf32> to vector<4x256xf32>
    %101 = arith.mulf %100, %97 : vector<4x256xf32>
    %c4_53 = arith.constant 4 : index
    %c0_54 = arith.constant 0 : index
    %c0_55 = arith.constant 0 : index
    %102 = vector.load %arg10[%c4_53, %c0_54, %c0_55] : memref<9x4x1xf32, #tpu.memory_space<vmem>>, vector<1x4x1xf32>
    %103 = vector.shape_cast %102 : vector<1x4x1xf32> to vector<4x1xf32>
    %104 = vector.broadcast %103 : vector<4x1xf32> to vector<4x256xf32>
    %105 = arith.mulf %104, %92 : vector<4x256xf32>
    %106 = arith.addf %101, %105 : vector<4x256xf32>
    %c255_i32_56 = arith.constant 255 : i32
    %107 = tpu.dynamic_rotate %96 by %c255_i32_56 dim 1 : vector<4x256xf32>, i32 -> vector<4x256xf32>
    %c5_57 = arith.constant 5 : index
    %c0_58 = arith.constant 0 : index
    %c0_59 = arith.constant 0 : index
    %108 = vector.load %arg10[%c5_57, %c0_58, %c0_59] : memref<9x4x1xf32, #tpu.memory_space<vmem>>, vector<1x4x1xf32>
    %109 = vector.shape_cast %108 : vector<1x4x1xf32> to vector<4x1xf32>
    %110 = vector.broadcast %109 : vector<4x1xf32> to vector<4x256xf32>
    %111 = arith.mulf %110, %107 : vector<4x256xf32>
    %112 = arith.addf %106, %111 : vector<4x256xf32>
    %c17_i32_60 = arith.constant 17 : i32
    %113 = tpu.dynamic_rotate %94 by %c17_i32_60 dim 1 : vector<4x256xf32>, i32 -> vector<4x256xf32>
    %c0_61 = arith.constant 0 : index
    %c0_62 = arith.constant 0 : index
    %c0_63 = arith.constant 0 : index
    %114 = vector.load %arg10[%c0_61, %c0_62, %c0_63] : memref<9x4x1xf32, #tpu.memory_space<vmem>>, vector<1x4x1xf32>
    %115 = vector.shape_cast %114 : vector<1x4x1xf32> to vector<4x1xf32>
    %116 = vector.broadcast %115 : vector<4x1xf32> to vector<4x256xf32>
    %117 = arith.mulf %116, %113 : vector<4x256xf32>
    %c16_i32_64 = arith.constant 16 : i32
    %118 = tpu.dynamic_rotate %92 by %c16_i32_64 dim 1 : vector<4x256xf32>, i32 -> vector<4x256xf32>
    %c1_65 = arith.constant 1 : index
    %c0_66 = arith.constant 0 : index
    %c0_67 = arith.constant 0 : index
    %119 = vector.load %arg10[%c1_65, %c0_66, %c0_67] : memref<9x4x1xf32, #tpu.memory_space<vmem>>, vector<1x4x1xf32>
    %120 = vector.shape_cast %119 : vector<1x4x1xf32> to vector<4x1xf32>
    %121 = vector.broadcast %120 : vector<4x1xf32> to vector<4x256xf32>
    %122 = arith.mulf %121, %118 : vector<4x256xf32>
    %123 = arith.addf %117, %122 : vector<4x256xf32>
    %c15_i32_68 = arith.constant 15 : i32
    %124 = tpu.dynamic_rotate %96 by %c15_i32_68 dim 1 : vector<4x256xf32>, i32 -> vector<4x256xf32>
    %c2_69 = arith.constant 2 : index
    %c0_70 = arith.constant 0 : index
    %c0_71 = arith.constant 0 : index
    %125 = vector.load %arg10[%c2_69, %c0_70, %c0_71] : memref<9x4x1xf32, #tpu.memory_space<vmem>>, vector<1x4x1xf32>
    %126 = vector.shape_cast %125 : vector<1x4x1xf32> to vector<4x1xf32>
    %127 = vector.broadcast %126 : vector<4x1xf32> to vector<4x256xf32>
    %128 = arith.mulf %127, %124 : vector<4x256xf32>
    %129 = arith.addf %123, %128 : vector<4x256xf32>
    %130 = vector.broadcast %7 : vector<1x256xf32> to vector<4x256xf32>
    %131 = arith.mulf %130, %129 : vector<4x256xf32>
    %132 = arith.addf %112, %131 : vector<4x256xf32>
    %c241_i32_72 = arith.constant 241 : i32
    %133 = tpu.dynamic_rotate %94 by %c241_i32_72 dim 1 : vector<4x256xf32>, i32 -> vector<4x256xf32>
    %c6_73 = arith.constant 6 : index
    %c0_74 = arith.constant 0 : index
    %c0_75 = arith.constant 0 : index
    %134 = vector.load %arg10[%c6_73, %c0_74, %c0_75] : memref<9x4x1xf32, #tpu.memory_space<vmem>>, vector<1x4x1xf32>
    %135 = vector.shape_cast %134 : vector<1x4x1xf32> to vector<4x1xf32>
    %136 = vector.broadcast %135 : vector<4x1xf32> to vector<4x256xf32>
    %137 = arith.mulf %136, %133 : vector<4x256xf32>
    %c240_i32_76 = arith.constant 240 : i32
    %138 = tpu.dynamic_rotate %92 by %c240_i32_76 dim 1 : vector<4x256xf32>, i32 -> vector<4x256xf32>
    %c7_77 = arith.constant 7 : index
    %c0_78 = arith.constant 0 : index
    %c0_79 = arith.constant 0 : index
    %139 = vector.load %arg10[%c7_77, %c0_78, %c0_79] : memref<9x4x1xf32, #tpu.memory_space<vmem>>, vector<1x4x1xf32>
    %140 = vector.shape_cast %139 : vector<1x4x1xf32> to vector<4x1xf32>
    %141 = vector.broadcast %140 : vector<4x1xf32> to vector<4x256xf32>
    %142 = arith.mulf %141, %138 : vector<4x256xf32>
    %143 = arith.addf %137, %142 : vector<4x256xf32>
    %c239_i32_80 = arith.constant 239 : i32
    %144 = tpu.dynamic_rotate %96 by %c239_i32_80 dim 1 : vector<4x256xf32>, i32 -> vector<4x256xf32>
    %c8_81 = arith.constant 8 : index
    %c0_82 = arith.constant 0 : index
    %c0_83 = arith.constant 0 : index
    %145 = vector.load %arg10[%c8_81, %c0_82, %c0_83] : memref<9x4x1xf32, #tpu.memory_space<vmem>>, vector<1x4x1xf32>
    %146 = vector.shape_cast %145 : vector<1x4x1xf32> to vector<4x1xf32>
    %147 = vector.broadcast %146 : vector<4x1xf32> to vector<4x256xf32>
    %148 = arith.mulf %147, %144 : vector<4x256xf32>
    %149 = arith.addf %143, %148 : vector<4x256xf32>
    %150 = vector.broadcast %9 : vector<1x256xf32> to vector<4x256xf32>
    %151 = arith.mulf %150, %149 : vector<4x256xf32>
    %152 = arith.addf %132, %151 : vector<4x256xf32>
    %c0_84 = arith.constant 0 : index
    %c0_85 = arith.constant 0 : index
    %153 = vector.load %arg11[%c0_84, %c0_85] : memref<4x1xf32, #tpu.memory_space<vmem>>, vector<4x1xf32>
    %154 = vector.broadcast %153 : vector<4x1xf32> to vector<4x256xf32>
    %155 = arith.addf %152, %154 : vector<4x256xf32>
    %156 = tpu.concatenate %92, %155 in 0 : vector<4x256xf32>, vector<4x256xf32> -> vector<8x256xf32>
    %157 = arith.addf %156, %1 : vector<8x256xf32>
    %c0_86 = arith.constant 0 : index
    %c0_87 = arith.constant 0 : index
    %c0_88 = arith.constant 0 : index
    %158 = vector.load %arg12[%c0_86, %c0_87, %c0_88] : memref<1x8x256xf32, #tpu.memory_space<vmem>>, vector<1x8x256xf32>
    %159 = vector.shape_cast %158 : vector<1x8x256xf32> to vector<8x256xf32>
    %160 = vector.shape_cast %157 : vector<8x256xf32> to vector<1x8x256xf32>
    tpu.vector_store %arg12[%c0_86, %c0_87, %c0_88], %160 {strides = array<i32>} : memref<1x8x256xf32, #tpu.memory_space<vmem>>, vector<1x8x256xf32>,
    return
  }
  func.func @transform_0(%arg0: i32) -> (i32, i32, i32) {
    %c0_i32 = arith.constant 0 : i32
    %c0_i32_0 = arith.constant 0 : i32
    %c0_i32_1 = arith.constant 0 : i32
    return %arg0, %c0_i32, %c0_i32_0 : i32, i32, i32
  }
  func.func @transform_1(%arg0: i32) -> (i32, i32, i32) {
    %c0_i32 = arith.constant 0 : i32
    %c0_i32_0 = arith.constant 0 : i32
    %c0_i32_1 = arith.constant 0 : i32
    %c0_i32_2 = arith.constant 0 : i32
    return %c0_i32, %c0_i32_0, %c0_i32_1 : i32, i32, i32
  }
  func.func @transform_2(%arg0: i32) -> (i32, i32) {
    %c0_i32 = arith.constant 0 : i32
    %c0_i32_0 = arith.constant 0 : i32
    %c0_i32_1 = arith.constant 0 : i32
    return %c0_i32, %c0_i32_0 : i32, i32
  }
  func.func @transform_3(%arg0: i32) -> (i32, i32) {
    %c0_i32 = arith.constant 0 : i32
    %c0_i32_0 = arith.constant 0 : i32
    %c0_i32_1 = arith.constant 0 : i32
    return %c0_i32, %c0_i32_0 : i32, i32
  }
  func.func @transform_4(%arg0: i32) -> (i32, i32, i32) {
    %c0_i32 = arith.constant 0 : i32
    %c0_i32_0 = arith.constant 0 : i32
    %c0_i32_1 = arith.constant 0 : i32
    %c0_i32_2 = arith.constant 0 : i32
    return %c0_i32, %c0_i32_0, %c0_i32_1 : i32, i32, i32
  }
  func.func @transform_5(%arg0: i32) -> (i32, i32) {
    %c0_i32 = arith.constant 0 : i32
    %c0_i32_0 = arith.constant 0 : i32
    %c0_i32_1 = arith.constant 0 : i32
    return %c0_i32, %c0_i32_0 : i32, i32
  }
  func.func @transform_6(%arg0: i32) -> (i32, i32) {
    %c0_i32 = arith.constant 0 : i32
    %c0_i32_0 = arith.constant 0 : i32
    %c0_i32_1 = arith.constant 0 : i32
    return %c0_i32, %c0_i32_0 : i32, i32
  }
  func.func @transform_7(%arg0: i32) -> (i32, i32) {
    %c0_i32 = arith.constant 0 : i32
    %c0_i32_0 = arith.constant 0 : i32
    %c0_i32_1 = arith.constant 0 : i32
    return %c0_i32, %c0_i32_0 : i32, i32
  }
  func.func @transform_8(%arg0: i32) -> (i32, i32) {
    %c0_i32 = arith.constant 0 : i32
    %c0_i32_0 = arith.constant 0 : i32
    %c0_i32_1 = arith.constant 0 : i32
    return %c0_i32, %c0_i32_0 : i32, i32
  }
  func.func @transform_9(%arg0: i32) -> (i32, i32, i32) {
    %c0_i32 = arith.constant 0 : i32
    %c0_i32_0 = arith.constant 0 : i32
    %c0_i32_1 = arith.constant 0 : i32
    %c0_i32_2 = arith.constant 0 : i32
    return %c0_i32, %c0_i32_0, %c0_i32_1 : i32, i32, i32
  }
  func.func @transform_10(%arg0: i32) -> (i32, i32) {
    %c0_i32 = arith.constant 0 : i32
    %c0_i32_0 = arith.constant 0 : i32
    %c0_i32_1 = arith.constant 0 : i32
    return %c0_i32, %c0_i32_0 : i32, i32
  }
  func.func @transform_11(%arg0: i32) -> (i32, i32, i32) {
    %c0_i32 = arith.constant 0 : i32
    %c0_i32_0 = arith.constant 0 : i32
    %c0_i32_1 = arith.constant 0 : i32
    return %arg0, %c0_i32, %c0_i32_0 : i32, i32, i32
  }
}

</mosaic_0001>

<llo_original>
// kernel: ghost_bottleneck_pallas.1
$region0: #{ghost_bottleneck_pallas.1}
  #allocation0 [shape = 'u32[]', space=smem, size = 0x4, offset = 0x4, fixed_abs, tag = 'smem constant byte address 0x4 - core index']
  #allocation1 [shape = 'u32[72,128]{1,0:T(1,128)}', space=vmem, size = 0x9000, scoped, tag = 'internal scratch']
  %s0 = inlined_call_operand.vmem [shape: f32[2,8,256], index: 0, kind: input, shape index: {}]
  %s1 = inlined_call_operand.vmem [shape: f32[4,1,256], index: 1, kind: input, shape index: {}]
  %s2 = inlined_call_operand.vmem [shape: bf16[8,8], index: 2, kind: input, shape index: {}]
  %s3 = inlined_call_operand.vmem [shape: f32[8,1], index: 3, kind: input, shape index: {}]
  %s4 = inlined_call_operand.vmem [shape: f32[9,8,1], index: 4, kind: input, shape index: {}]
  %s5 = inlined_call_operand.vmem [shape: f32[8,1], index: 5, kind: input, shape index: {}]
  %s6 = inlined_call_operand.vmem [shape: bf16[4,8], index: 6, kind: input, shape index: {}]
  %s7 = inlined_call_operand.vmem [shape: bf16[4,8], index: 7, kind: input, shape index: {}]
  %s8 = inlined_call_operand.vmem [shape: f32[4,1], index: 8, kind: input, shape index: {}]
  %s9 = inlined_call_operand.vmem [shape: f32[9,4,1], index: 9, kind: input, shape index: {}]
  %s10 = inlined_call_operand.vmem [shape: f32[4,1], index: 10, kind: input, shape index: {}]
  %s11 = inlined_call_operand.vmem [shape: f32[2,8,256], index: 11, kind: output, shape index: {}]
  %s12 = sld [smem:[#allocation0]]
  $region77: #{ghost_bottleneck_pallas.1} parent=0
    _
  %s14 = ssub.s32 1, %s12
  %s15 = scalar_select 0, %s14, %s12
  loop: start=0, step=1, limit=4
  $region2: #{ghost_bottleneck_pallas.1} parent=0 // loop_pre_header
    _
  $region3: #{ghost_bottleneck_pallas.1} parent=0 // loop_header
    %s17 = sphi 0, %s21
    %p18 = scmp.ge.s32.totalorder %s17, 4
    %s27 = sphi 0, %s29
    %s30 = sphi 0, %s27
    %s31 = sphi 0, %s30
    %s47 = sphi 0, %s31
    %s51 = sphi 0, %s51
    %s53 = sphi 0, %s51
    %s54 = sphi 0, %s53
    %s68 = sphi 0, %s54
    %s72 = sphi 0, %s72
    %s74 = sphi 0, %s72
    %s75 = sphi 0, %s74
    %s89 = sphi 0, %s75
    %s93 = sphi 0, %s93
    %s95 = sphi 0, %s93
    %s96 = sphi 0, %s95
    %s110 = sphi 0, %s96
    %s114 = sphi 0, %s114
    %s116 = sphi 0, %s114
    %s117 = sphi 0, %s116
    %s131 = sphi 0, %s117
    %s135 = sphi 0, %s135
    %s137 = sphi 0, %s135
    %s138 = sphi 0, %s137
    %s152 = sphi 0, %s138
    %s156 = sphi 0, %s156
    %s158 = sphi 0, %s156
    %s159 = sphi 0, %s158
    %s173 = sphi 0, %s159
    %s177 = sphi 0, %s177
    %s179 = sphi 0, %s177
    %s180 = sphi 0, %s179
    %s194 = sphi 0, %s180
    %s198 = sphi 0, %s198
    %s200 = sphi 0, %s198
    %s201 = sphi 0, %s200
    %s215 = sphi 0, %s201
    %s219 = sphi 0, %s219
    %s221 = sphi 0, %s219
    %s222 = sphi 0, %s221
    %s236 = sphi 0, %s222
    %s240 = sphi 0, %s240
    %s242 = sphi 0, %s240
    %s243 = sphi 0, %s242
    %s257 = sphi 0, %s243
    %s263 = sphi 0, %s265
    %s266 = sphi 0, %s263
    %s267 = sphi 0, %s266
    %s283 = sphi 0, %s267
  $region4: #{ghost_bottleneck_pallas.1} parent=0 // loop_header_branch
    %20 = sbr.rel (%p18) target = $region8
  $region5: #{ghost_bottleneck_pallas.1} parent=0 // loop_body
    %s22 = ssub.s32 %s17, 1
    %s23 = ssub.s32 %s17, 2
    %s24 = sadd.s32 %s17, 1
    %s25 = ssub.s32 %s17, %s24
    %p26 = scmp.eq.s32.totalorder %s25, 0
    %s28 = sadd.s32 %s27, 1
    %s29 = scalar_select %p26, %s27, %s28
    %p32 = pneg %p26
    %p33 = scmp.eq.s32.totalorder %s17, 1
    %p34 = por %p32, %p33
    %p35 = scmp.ne.s32.totalorder %s27, %s30
    %p36 = scmp.eq.s32.totalorder %s17, 0
    %p37 = por %p35, %p36
    %p38 = scmp.ne.s32.totalorder %s27, %s30
    %p39 = scmp.eq.s32.totalorder %s22, 1
    %p40 = por %p38, %p39
    %p41 = scmp.ne.s32.totalorder %s30, %s31
    %p42 = scmp.eq.s32.totalorder %s22, 0
    %p43 = por %p41, %p42
    %p44 = scmp.ne.s32.totalorder %s30, %s31
    %p45 = scmp.eq.s32.totalorder %s23, 1
    %p46 = por %p44, %p45
    %p48 = scmp.ne.s32.totalorder %s31, %s47
    %p49 = scmp.eq.s32.totalorder %s23, 0
    %p50 = por %p48, %p49
    %s52 = sadd.s32 %s51, 1
    %p55 = scmp.eq.s32.totalorder %s17, 1
    %p56 = scmp.ne.s32.totalorder %s51, %s53
    %p57 = scmp.eq.s32.totalorder %s17, 0
    %p58 = por %p56, %p57
    %p59 = scmp.ne.s32.totalorder %s51, %s53
    %p60 = scmp.eq.s32.totalorder %s22, 1
    %p61 = por %p59, %p60
    %p62 = scmp.ne.s32.totalorder %s53, %s54
    %p63 = scmp.eq.s32.totalorder %s22, 0
    %p64 = por %p62, %p63
    %p65 = scmp.ne.s32.totalorder %s53, %s54
    %p66 = scmp.eq.s32.totalorder %s23, 1
    %p67 = por %p65, %p66
    %p69 = scmp.ne.s32.totalorder %s54, %s68
    %p70 = scmp.eq.s32.totalorder %s23, 0
    %p71 = por %p69, %p70
    %s73 = sadd.s32 %s72, 1
    %p76 = scmp.eq.s32.totalorder %s17, 1
    %p77 = scmp.ne.s32.totalorder %s72, %s74
    %p78 = scmp.eq.s32.totalorder %s17, 0
    %p79 = por %p77, %p78
    %p80 = scmp.ne.s32.totalorder %s72, %s74
    %p81 = scmp.eq.s32.totalorder %s22, 1
    %p82 = por %p80, %p81
    %p83 = scmp.ne.s32.totalorder %s74, %s75
    %p84 = scmp.eq.s32.totalorder %s22, 0
    %p85 = por %p83, %p84
    %p86 = scmp.ne.s32.totalorder %s74, %s75
    %p87 = scmp.eq.s32.totalorder %s23, 1
    %p88 = por %p86, %p87
    %p90 = scmp.ne.s32.totalorder %s75, %s89
    %p91 = scmp.eq.s32.totalorder %s23, 0
    %p92 = por %p90, %p91
    %s94 = sadd.s32 %s93, 1
    %p97 = scmp.eq.s32.totalorder %s17, 1
    %p98 = scmp.ne.s32.totalorder %s93, %s95
    %p99 = scmp.eq.s32.totalorder %s17, 0
    %p100 = por %p98, %p99
    %p101 = scmp.ne.s32.totalorder %s93, %s95
    %p102 = scmp.eq.s32.totalorder %s22, 1
    %p103 = por %p101, %p102
    %p104 = scmp.ne.s32.totalorder %s95, %s96
    %p105 = scmp.eq.s32.totalorder %s22, 0
    %p106 = por %p104, %p105
    %p107 = scmp.ne.s32.totalorder %s95, %s96
    %p108 = scmp.eq.s32.totalorder %s23, 1
    %p109 = por %p107, %p108
    %p111 = scmp.ne.s32.totalorder %s96, %s110
    %p112 = scmp.eq.s32.totalorder %s23, 0
    %p113 = por %p111, %p112
    %s115 = sadd.s32 %s114, 1
    %p118 = scmp.eq.s32.totalorder %s17, 1
    %p119 = scmp.ne.s32.totalorder %s114, %s116
    %p120 = scmp.eq.s32.totalorder %s17, 0
    %p121 = por %p119, %p120
    %p122 = scmp.ne.s32.totalorder %s114, %s116
    %p123 = scmp.eq.s32.totalorder %s22, 1
    %p124 = por %p122, %p123
    %p125 = scmp.ne.s32.totalorder %s116, %s117
    %p126 = scmp.eq.s32.totalorder %s22, 0
    %p127 = por %p125, %p126
    %p128 = scmp.ne.s32.totalorder %s116, %s117
    %p129 = scmp.eq.s32.totalorder %s23, 1
    %p130 = por %p128, %p129
    %p132 = scmp.ne.s32.totalorder %s117, %s131
    %p133 = scmp.eq.s32.totalorder %s23, 0
    %p134 = por %p132, %p133
    %s136 = sadd.s32 %s135, 1
    %p139 = scmp.eq.s32.totalorder %s17, 1
    %p140 = scmp.ne.s32.totalorder %s135, %s137
    %p141 = scmp.eq.s32.totalorder %s17, 0
    %p142 = por %p140, %p141
    %p143 = scmp.ne.s32.totalorder %s135, %s137
    %p144 = scmp.eq.s32.totalorder %s22, 1
    %p145 = por %p143, %p144
    %p146 = scmp.ne.s32.totalorder %s137, %s138
    %p147 = scmp.eq.s32.totalorder %s22, 0
    %p148 = por %p146, %p147
    %p149 = scmp.ne.s32.totalorder %s137, %s138
    %p150 = scmp.eq.s32.totalorder %s23, 1
    %p151 = por %p149, %p150
    %p153 = scmp.ne.s32.totalorder %s138, %s152
    %p154 = scmp.eq.s32.totalorder %s23, 0
    %p155 = por %p153, %p154
    %s157 = sadd.s32 %s156, 1
    %p160 = scmp.eq.s32.totalorder %s17, 1
    %p161 = scmp.ne.s32.totalorder %s156, %s158
    %p162 = scmp.eq.s32.totalorder %s17, 0
    %p163 = por %p161, %p162
    %p164 = scmp.ne.s32.totalorder %s156, %s158
    %p165 = scmp.eq.s32.totalorder %s22, 1
    %p166 = por %p164, %p165
    %p167 = scmp.ne.s32.totalorder %s158, %s159
    %p168 = scmp.eq.s32.totalorder %s22, 0
    %p169 = por %p167, %p168
    %p170 = scmp.ne.s32.totalorder %s158, %s159
    %p171 = scmp.eq.s32.totalorder %s23, 1
    %p172 = por %p170, %p171
    %p174 = scmp.ne.s32.totalorder %s159, %s173
    %p175 = scmp.eq.s32.totalorder %s23, 0
    %p176 = por %p174, %p175
    %s178 = sadd.s32 %s177, 1
    %p181 = scmp.eq.s32.totalorder %s17, 1
    %p182 = scmp.ne.s32.totalorder %s177, %s179
    %p183 = scmp.eq.s32.totalorder %s17, 0
    %p184 = por %p182, %p183
    %p185 = scmp.ne.s32.totalorder %s177, %s179
    %p186 = scmp.eq.s32.totalorder %s22, 1
    %p187 = por %p185, %p186
    %p188 = scmp.ne.s32.totalorder %s179, %s180
    %p189 = scmp.eq.s32.totalorder %s22, 0
    %p190 = por %p188, %p189
    %p191 = scmp.ne.s32.totalorder %s179, %s180
    %p192 = scmp.eq.s32.totalorder %s23, 1
    %p193 = por %p191, %p192
    %p195 = scmp.ne.s32.totalorder %s180, %s194
    %p196 = scmp.eq.s32.totalorder %s23, 0
    %p197 = por %p195, %p196
    %s199 = sadd.s32 %s198, 1
    %p202 = scmp.eq.s32.totalorder %s17, 1
    %p203 = scmp.ne.s32.totalorder %s198, %s200
    %p204 = scmp.eq.s32.totalorder %s17, 0
    %p205 = por %p203, %p204
    %p206 = scmp.ne.s32.totalorder %s198, %s200
    %p207 = scmp.eq.s32.totalorder %s22, 1
    %p208 = por %p206, %p207
    %p209 = scmp.ne.s32.totalorder %s200, %s201
    %p210 = scmp.eq.s32.totalorder %s22, 0
    %p211 = por %p209, %p210
    %p212 = scmp.ne.s32.totalorder %s200, %s201
    %p213 = scmp.eq.s32.totalorder %s23, 1
    %p214 = por %p212, %p213
    %p216 = scmp.ne.s32.totalorder %s201, %s215
    %p217 = scmp.eq.s32.totalorder %s23, 0
    %p218 = por %p216, %p217
    %s220 = sadd.s32 %s219, 1
    %p223 = scmp.eq.s32.totalorder %s17, 1
    %p224 = scmp.ne.s32.totalorder %s219, %s221
    %p225 = scmp.eq.s32.totalorder %s17, 0
    %p226 = por %p224, %p225
    %p227 = scmp.ne.s32.totalorder %s219, %s221
    %p228 = scmp.eq.s32.totalorder %s22, 1
    %p229 = por %p227, %p228
    %p230 = scmp.ne.s32.totalorder %s221, %s222
    %p231 = scmp.eq.s32.totalorder %s22, 0
    %p232 = por %p230, %p231
    %p233 = scmp.ne.s32.totalorder %s221, %s222
    %p234 = scmp.eq.s32.totalorder %s23, 1
    %p235 = por %p233, %p234
    %p237 = scmp.ne.s32.totalorder %s222, %s236
    %p238 = scmp.eq.s32.totalorder %s23, 0
    %p239 = por %p237, %p238
    %s241 = sadd.s32 %s240, 1
    %p244 = scmp.eq.s32.totalorder %s17, 1
    %p245 = scmp.ne.s32.totalorder %s240, %s242
    %p246 = scmp.eq.s32.totalorder %s17, 0
    %p247 = por %p245, %p246
    %p248 = scmp.ne.s32.totalorder %s240, %s242
    %p249 = scmp.eq.s32.totalorder %s22, 1
    %p250 = por %p248, %p249
    %p251 = scmp.ne.s32.totalorder %s242, %s243
    %p252 = scmp.eq.s32.totalorder %s22, 0
    %p253 = por %p251, %p252
    %p254 = scmp.ne.s32.totalorder %s242, %s243
    %p255 = scmp.eq.s32.totalorder %s23, 1
    %p256 = por %p254, %p255
    %p258 = scmp.ne.s32.totalorder %s243, %s257
    %p259 = scmp.eq.s32.totalorder %s23, 0
    %p260 = por %p258, %p259
    %s261 = ssub.s32 %s17, %s24
    %p262 = scmp.eq.s32.totalorder %s261, 0
    %s264 = sadd.s32 %s263, 1
    %s265 = scalar_select %p262, %s263, %s264
    %p268 = pneg %p262
    %p269 = scmp.eq.s32.totalorder %s17, 1
    %p270 = por %p268, %p269
    %p271 = scmp.ne.s32.totalorder %s263, %s266
    %p272 = scmp.eq.s32.totalorder %s17, 0
    %p273 = por %p271, %p272
    %p274 = scmp.ne.s32.totalorder %s263, %s266
    %p275 = scmp.eq.s32.totalorder %s22, 1
    %p276 = por %p274, %p275
    %p277 = scmp.ne.s32.totalorder %s266, %s267
    %p278 = scmp.eq.s32.totalorder %s22, 0
    %p279 = por %p277, %p278
    %p280 = scmp.ne.s32.totalorder %s266, %s267
    %p281 = scmp.eq.s32.totalorder %s23, 1
    %p282 = por %p280, %p281
    %p284 = scmp.ne.s32.totalorder %s267, %s283
    %p285 = scmp.eq.s32.totalorder %s23, 0
    %p286 = por %p284, %p285
    %p287 = scmp.le.s32.totalorder 1, %s17
    %p288 = scmp.lt.s32.totalorder %s17, 3
    %p289 = pnand %p287, %p288
    %p290 = pneg %p289
    // Predicated region
    $region9: #{ghost_bottleneck_pallas.1} parent=5 // pred_check
      _
    $region10: #{ghost_bottleneck_pallas.1} parent=5 // pred_check_branch
      %292 = sbr.rel (%p289) target = $region12
    $region11: #{ghost_bottleneck_pallas.1} parent=5 // pred_region
      %s293 = ssub.s32 %s17, 1
      // Predicated region
      $region13: #{ghost_bottleneck_pallas.1} parent=11 // pred_check
        %p294 = pneg %p64
      $region14: #{ghost_bottleneck_pallas.1} parent=11 // pred_check_branch
        %296 = sbr.rel (%p294) target = $region16
      $region15: #{ghost_bottleneck_pallas.1} parent=11 // pred_region
        _
      $region16: #{ghost_bottleneck_pallas.1} parent=11 // pred_fallthru
        _
      // Predicated region
      $region17: #{ghost_bottleneck_pallas.1} parent=11 // pred_check
        %p297 = pneg %p85
      $region18: #{ghost_bottleneck_pallas.1} parent=11 // pred_check_branch
        %299 = sbr.rel (%p297) target = $region20
      $region19: #{ghost_bottleneck_pallas.1} parent=11 // pred_region
        _
      $region20: #{ghost_bottleneck_pallas.1} parent=11 // pred_fallthru
        _
      // Predicated region
      $region21: #{ghost_bottleneck_pallas.1} parent=11 // pred_check
        %p300 = pneg %p106
      $region22: #{ghost_bottleneck_pallas.1} parent=11 // pred_check_branch
        %302 = sbr.rel (%p300) target = $region24
      $region23: #{ghost_bottleneck_pallas.1} parent=11 // pred_region
        _
      $region24: #{ghost_bottleneck_pallas.1} parent=11 // pred_fallthru
        _
      // Predicated region
      $region25: #{ghost_bottleneck_pallas.1} parent=11 // pred_check
        %p303 = pneg %p127
      $region26: #{ghost_bottleneck_pallas.1} parent=11 // pred_check_branch
        %305 = sbr.rel (%p303) target = $region28
      $region27: #{ghost_bottleneck_pallas.1} parent=11 // pred_region
        _
      $region28: #{ghost_bottleneck_pallas.1} parent=11 // pred_fallthru
        _
      // Predicated region
      $region29: #{ghost_bottleneck_pallas.1} parent=11 // pred_check
        %p306 = pneg %p148
      $region30: #{ghost_bottleneck_pallas.1} parent=11 // pred_check_branch
        %308 = sbr.rel (%p306) target = $region32
      $region31: #{ghost_bottleneck_pallas.1} parent=11 // pred_region
        _
      $region32: #{ghost_bottleneck_pallas.1} parent=11 // pred_fallthru
        _
      // Predicated region
      $region33: #{ghost_bottleneck_pallas.1} parent=11 // pred_check
        %p309 = pneg %p169
      $region34: #{ghost_bottleneck_pallas.1} parent=11 // pred_check_branch
        %311 = sbr.rel (%p309) target = $region36
      $region35: #{ghost_bottleneck_pallas.1} parent=11 // pred_region
        _
      $region36: #{ghost_bottleneck_pallas.1} parent=11 // pred_fallthru
        _
      // Predicated region
      $region37: #{ghost_bottleneck_pallas.1} parent=11 // pred_check
        %p312 = pneg %p190
      $region38: #{ghost_bottleneck_pallas.1} parent=11 // pred_check_branch
        %314 = sbr.rel (%p312) target = $region40
      $region39: #{ghost_bottleneck_pallas.1} parent=11 // pred_region
        _
      $region40: #{ghost_bottleneck_pallas.1} parent=11 // pred_fallthru
        _
      // Predicated region
      $region41: #{ghost_bottleneck_pallas.1} parent=11 // pred_check
        %p315 = pneg %p211
      $region42: #{ghost_bottleneck_pallas.1} parent=11 // pred_check_branch
        %317 = sbr.rel (%p315) target = $region44
      $region43: #{ghost_bottleneck_pallas.1} parent=11 // pred_region
        _
      $region44: #{ghost_bottleneck_pallas.1} parent=11 // pred_fallthru
        _
      // Predicated region
      $region45: #{ghost_bottleneck_pallas.1} parent=11 // pred_check
        %p318 = pneg %p232
      $region46: #{ghost_bottleneck_pallas.1} parent=11 // pred_check_branch
        %320 = sbr.rel (%p318) target = $region48
      $region47: #{ghost_bottleneck_pallas.1} parent=11 // pred_region
        _
      $region48: #{ghost_bottleneck_pallas.1} parent=11 // pred_fallthru
        _
      // Predicated region
      $region49: #{ghost_bottleneck_pallas.1} parent=11 // pred_check
        %p321 = pneg %p253
      $region50: #{ghost_bottleneck_pallas.1} parent=11 // pred_check_branch
        %323 = sbr.rel (%p321) target = $region52
      $region51: #{ghost_bottleneck_pallas.1} parent=11 // pred_region
        _
      $region52: #{ghost_bottleneck_pallas.1} parent=11 // pred_fallthru
        _
    $region12: #{ghost_bottleneck_pallas.1} parent=5 // pred_fallthru
      _
    %p324 = scmp.lt.s32.totalorder %s17, 2
    // Predicated region
    $region53: #{ghost_bottleneck_pallas.1} parent=5 // pred_check
      %p325 = pneg %p324
    $region54: #{ghost_bottleneck_pallas.1} parent=5 // pred_check_branch
      %327 = sbr.rel (%p325) target = $region56
    $region55: #{ghost_bottleneck_pallas.1} parent=5 // pred_region
      // Predicated region
      $region57: #{ghost_bottleneck_pallas.1} parent=55 // pred_check
        %p328 = pneg %p37
      $region58: #{ghost_bottleneck_pallas.1} parent=55 // pred_check_branch
        %330 = sbr.rel (%p328) target = $region60
      $region59: #{ghost_bottleneck_pallas.1} parent=55 // pred_region
        %p331 = scmp.lt.s32.totalorder %s17, 1
        %s332 = scalar_select %p331, %s17, 1
        %s333 = smul.addr %s332, 2
        %s334 = smul.addr %s333, 8
        %s335 = scalar_lea.vmem %s0, %s334
      $region60: #{ghost_bottleneck_pallas.1} parent=55 // pred_fallthru
        _
    $region56: #{ghost_bottleneck_pallas.1} parent=5 // pred_fallthru
      _
    %p336 = scmp.le.s32.totalorder 1, %s17
    %p337 = scmp.lt.s32.totalorder %s17, 3
    %p338 = pnand %p336, %p337
    %p339 = pneg %p338
    // Predicated region
    $region61: #{ghost_bottleneck_pallas.1} parent=5 // pred_check
      _
    $region62: #{ghost_bottleneck_pallas.1} parent=5 // pred_check_branch
      %341 = sbr.rel (%p338) target = $region64
    $region63: #{ghost_bottleneck_pallas.1} parent=5 // pred_region
      %s342 = ssub.s32 %s17, 1
      %p343 = scmp.lt.s32.totalorder %s22, 1
      %s344 = scalar_select %p343, %s22, 1
      %s345 = smul.addr %s344, 2
      %s346 = smul.addr %s345, 8
      %s347 = scalar_lea.vmem %s0, %s346
      %p348 = pneg %p43
      %p349 = pneg %p40
      %p350 = pneg %p64
      %p351 = pneg %p61
      %p352 = pneg %p85
      %p353 = pneg %p82
      %p354 = pneg %p106
      %p355 = pneg %p103
      %p356 = pneg %p127
      %p357 = pneg %p124
      %p358 = pneg %p148
      %p359 = pneg %p145
      %p360 = pneg %p169
      %p361 = pneg %p166
      %p362 = pneg %p190
      %p363 = pneg %p187
      %p364 = pneg %p211
      %p365 = pneg %p208
      %p366 = pneg %p232
      %p367 = pneg %p229
      %p368 = pneg %p253
      %p369 = pneg %p250
      %p370 = pneg %p279
      %p371 = pneg %p276
      %p372 = scmp.lt.s32.totalorder %s22, 1
      %s373 = scalar_select %p372, %s22, 1
      %s374 = smul.addr %s373, 2
      %s375 = smul.addr %s374, 8
      %s376 = scalar_lea.vmem %s11, %s375
      %p377 = scmp.lt.s32.totalorder %s22, 1
      %s378 = scalar_select %p377, %s22, 1
      %s379 = smul.addr %s378, 2
      %s380 = smul.addr %s379, 8
      %s381 = scalar_lea.vmem %s0, %s380
      %p382 = scmp.lt.s32.totalorder %s22, 1
      %s383 = scalar_select %p382, %s22, 1
      %s384 = smul.addr %s383, 2
      %s385 = smul.addr %s384, 8
      %s386 = scalar_lea.vmem %s11, %s385
      %v388 = vld [vmem:[%s381] sm:$0xff]
      %v389 = vld [vmem:[%s381 + $0x8] sm:$0xff]
      %v390 = vld [vmem:[%s1] sm:$0x3]
      %s391 = scalar_lea.vmem %s1, 2
      %v392 = vld [vmem:[%s391] sm:$0x3]
      %s393 = scalar_lea.vmem %s1, 4
      %v394 = vld [vmem:[%s393] sm:$0x3]
      %s395 = scalar_lea.vmem %s1, 6
      %v396 = vld [vmem:[%s395] sm:$0x3]
      %v397 = vld [vmem:[%s2] sm:$0xf]
      %v398 = vpack.c.bf16 %v388, %v388
      %v399 = vpack.c.bf16 %v389, %v389
      %v400 = vld [vmem:[%s3] sm:$0xff]
      %402 = vset.pattern.permute.xlu0 0
      %403 = vperm.xlu0 %402, %v400
      %v404 = vpop.permute.xlu0 %403
      %vm406 = vcmask 64512
      %v408 = vsel %vm406, %v397, 0
      %vm410 = vcmask 1043456
      %v412 = vsel %vm410, %v398, 0
      %v415 = vsel %vm410, %v399, 0
      %417 = vmatpush.bf16.msra.mxu0 0
      %418 = vmatpush.bf16.msra.mxu0 0
      %419 = vmatpush.bf16.msra.mxu0 0
      %420 = vmatpush.bf16.msra.mxu0 0
      %421 = vmatpush.bf16.msra.mxu0 0
      %422 = vmatpush.bf16.msra.mxu0 0
      %423 = vmatpush.bf16.msra.mxu0 0
      %424 = vmatpush.bf16.msra.mxu0 %v412
      %425 = vmatmul.bf16.gmra.mxu0 %v408
      %v426 = vpop.f32.mrf.mxu0
      %v427 = vadd.f32 %v404, %v426
      %v428 = vpop.f32.mrf.mxu0
      %429 = vdwg.mxu0
      %430 = vmatpush.bf16.msra.mxu0 0
      %431 = vmatpush.bf16.msra.mxu0 0
      %432 = vmatpush.bf16.msra.mxu0 0
      %433 = vmatpush.bf16.msra.mxu0 0
      %434 = vmatpush.bf16.msra.mxu0 0
      %435 = vmatpush.bf16.msra.mxu0 0
      %436 = vmatpush.bf16.msra.mxu0 0
      %437 = vmatpush.bf16.msra.mxu0 %v415
      %438 = vmatmul.bf16.gmra.mxu0 %v408
      %v439 = vpop.f32.mrf.mxu0
      %v440 = vadd.f32 %v404, %v439
      %v441 = vpop.f32.mrf.mxu0
      %442 = vdwg.mxu0
      %v443 = vmax.f32 %v427, 0.0
      %v444 = vmax.f32 %v440, 0.0
      %v446 = vperm.slane %v392, 0
      %v447 = vperm.slane %v392, 1
      %v450 = vmul.f32 %v443, %v446
      %v451 = vmul.f32 %v444, %v447
      %v453 = vperm.slane %v390, 0
      %v454 = vperm.slane %v390, 1
      %v457 = vmul.f32 %v443, %v453
      %v458 = vmul.f32 %v444, %v454
      %459 = vrot.lane.b32.xlu0 %v450, 1
      %v460 = vpop.permute.xlu0 %459
      %461 = vrot.lane.b32.xlu0 %v451, 1
      %v462 = vpop.permute.xlu0 %461
      %v463 = vlaneseq
      %v464 = vand.u32 %v463, 127
      %vm465 = vcmp.lt.s32.totalorder %v464, 1
      %v466 = vsel %vm465, %v460, %v462
      %v467 = vsel %vm465, %v462, %v460
      %s468 = scalar_lea.vmem %s4, 24
      %v469 = vld [vmem:[%s468] sm:$0xff]
      %471 = vset.pattern.permute.xlu0 0
      %472 = vperm.xlu0 %471, %v469
      %v473 = vpop.permute.xlu0 %472
      %v475 = vmul.f32 %v473, %v467
      %v476 = vmul.f32 %v473, %v466
      %s477 = scalar_lea.vmem %s4, 32
      %v478 = vld [vmem:[%s477] sm:$0xff]
      %480 = vset.pattern.permute.xlu0 0
      %481 = vperm.xlu0 %480, %v478
      %v482 = vpop.permute.xlu0 %481
      %v484 = vmul.f32 %v482, %v443
      %v485 = vmul.f32 %v482, %v444
      %v486 = vadd.f32 %v475, %v484
      %v487 = vadd.f32 %v476, %v485
      %488 = vrot.lane.b32.xlu0 %v457, 127
      %v489 = vpop.permute.xlu0 %488
      %490 = vrot.lane.b32.xlu0 %v458, 127
      %v491 = vpop.permute.xlu0 %490
      %vm492 = vcmp.lt.s32.totalorder %v464, 127
      %v493 = vsel %vm492, %v489, %v491
      %v494 = vsel %vm492, %v491, %v489
      %s495 = scalar_lea.vmem %s4, 40
      %v496 = vld [vmem:[%s495] sm:$0xff]
      %498 = vset.pattern.permute.xlu0 0
      %499 = vperm.xlu0 %498, %v496
      %v500 = vpop.permute.xlu0 %499
      %v502 = vmul.f32 %v500, %v493
      %v503 = vmul.f32 %v500, %v494
      %v504 = vadd.f32 %v486, %v502
      %v505 = vadd.f32 %v487, %v503
      %506 = vrot.lane.b32.xlu0 %v450, 17
      %v507 = vpop.permute.xlu0 %506
      %508 = vrot.lane.b32.xlu0 %v451, 17
      %v509 = vpop.permute.xlu0 %508
      %vm510 = vcmp.lt.s32.totalorder %v464, 17
      %v511 = vsel %vm510, %v507, %v509
      %v512 = vsel %vm510, %v509, %v507
      %v513 = vld [vmem:[%s4] sm:$0xff]
      %515 = vset.pattern.permute.xlu0 0
      %516 = vperm.xlu0 %515, %v513
      %v517 = vpop.permute.xlu0 %516
      %v519 = vmul.f32 %v517, %v512
      %v520 = vmul.f32 %v517, %v511
      %521 = vrot.lane.b32.xlu0 %v443, 16
      %v522 = vpop.permute.xlu0 %521
      %523 = vrot.lane.b32.xlu0 %v444, 16
      %v524 = vpop.permute.xlu0 %523
      %vm525 = vcmp.lt.s32.totalorder %v464, 16
      %v526 = vsel %vm525, %v522, %v524
      %v527 = vsel %vm525, %v524, %v522
      %s528 = scalar_lea.vmem %s4, 8
      %v529 = vld [vmem:[%s528] sm:$0xff]
      %531 = vset.pattern.permute.xlu0 0
      %532 = vperm.xlu0 %531, %v529
      %v533 = vpop.permute.xlu0 %532
      %v535 = vmul.f32 %v533, %v527
      %v536 = vmul.f32 %v533, %v526
      %v537 = vadd.f32 %v519, %v535
      %v538 = vadd.f32 %v520, %v536
      %539 = vrot.lane.b32.xlu0 %v457, 15
      %v540 = vpop.permute.xlu0 %539
      %541 = vrot.lane.b32.xlu0 %v458, 15
      %v542 = vpop.permute.xlu0 %541
      %vm543 = vcmp.lt.s32.totalorder %v464, 15
      %v544 = vsel %vm543, %v540, %v542
      %v545 = vsel %vm543, %v542, %v540
      %s546 = scalar_lea.vmem %s4, 16
      %v547 = vld [vmem:[%s546] sm:$0xff]
      %549 = vset.pattern.permute.xlu0 0
      %550 = vperm.xlu0 %549, %v547
      %v551 = vpop.permute.xlu0 %550
      %v553 = vmul.f32 %v551, %v545
      %v554 = vmul.f32 %v551, %v544
      %v555 = vadd.f32 %v537, %v553
      %v556 = vadd.f32 %v538, %v554
      %v558 = vperm.slane %v394, 0
      %v559 = vperm.slane %v394, 1
      %v562 = vmul.f32 %v558, %v555
      %v563 = vmul.f32 %v559, %v556
      %v564 = vadd.f32 %v504, %v562
      %v565 = vadd.f32 %v505, %v563
      %566 = vrot.lane.b32.xlu0 %v450, 113
      %v567 = vpop.permute.xlu0 %566
      %568 = vrot.lane.b32.xlu0 %v451, 113
      %v569 = vpop.permute.xlu0 %568
      %vm570 = vcmp.lt.s32.totalorder %v464, 113
      %v571 = vsel %vm570, %v567, %v569
      %v572 = vsel %vm570, %v569, %v567
      %s573 = scalar_lea.vmem %s4, 48
      %v574 = vld [vmem:[%s573] sm:$0xff]
      %576 = vset.pattern.permute.xlu0 0
      %577 = vperm.xlu0 %576, %v574
      %v578 = vpop.permute.xlu0 %577
      %v580 = vmul.f32 %v578, %v571
      %v581 = vmul.f32 %v578, %v572
      %582 = vrot.lane.b32.xlu0 %v443, 112
      %v583 = vpop.permute.xlu0 %582
      %584 = vrot.lane.b32.xlu0 %v444, 112
      %v585 = vpop.permute.xlu0 %584
      %vm586 = vcmp.lt.s32.totalorder %v464, 112
      %v587 = vsel %vm586, %v583, %v585
      %v588 = vsel %vm586, %v585, %v583
      %s589 = scalar_lea.vmem %s4, 56
      %v590 = vld [vmem:[%s589] sm:$0xff]
      %592 = vset.pattern.permute.xlu0 0
      %593 = vperm.xlu0 %592, %v590
      %v594 = vpop.permute.xlu0 %593
      %v596 = vmul.f32 %v594, %v587
      %v597 = vmul.f32 %v594, %v588
      %v598 = vadd.f32 %v580, %v596
      %v599 = vadd.f32 %v581, %v597
      %600 = vrot.lane.b32.xlu0 %v457, 111
      %v601 = vpop.permute.xlu0 %600
      %602 = vrot.lane.b32.xlu0 %v458, 111
      %v603 = vpop.permute.xlu0 %602
      %vm604 = vcmp.lt.s32.totalorder %v464, 111
      %v605 = vsel %vm604, %v601, %v603
      %v606 = vsel %vm604, %v603, %v601
      %s607 = scalar_lea.vmem %s4, 64
      %v608 = vld [vmem:[%s607] sm:$0xff]
      %610 = vset.pattern.permute.xlu0 0
      %611 = vperm.xlu0 %610, %v608
      %v612 = vpop.permute.xlu0 %611
      %v614 = vmul.f32 %v612, %v605
      %v615 = vmul.f32 %v612, %v606
      %v616 = vadd.f32 %v598, %v614
      %v617 = vadd.f32 %v599, %v615
      %v619 = vperm.slane %v396, 0
      %v620 = vperm.slane %v396, 1
      %v623 = vmul.f32 %v619, %v616
      %v624 = vmul.f32 %v620, %v617
      %v625 = vadd.f32 %v564, %v623
      %v626 = vadd.f32 %v565, %v624
      %v627 = vld [vmem:[%s5] sm:$0xff]
      %629 = vset.pattern.permute.xlu0 0
      %630 = vperm.xlu0 %629, %v627
      %v631 = vpop.permute.xlu0 %630
      %v633 = vadd.f32 %v625, %v631
      %v634 = vadd.f32 %v626, %v631
      %v635 = vmax.f32 %v633, 0.0
      %v636 = vmax.f32 %v634, 0.0
      %v637 = vld [vmem:[%s6] sm:$0x3]
      %v638 = vpack.c.bf16 %v443, %v443
      %v639 = vpack.c.bf16 %v444, %v444
      %v640 = vld [vmem:[%s7] sm:$0x3]
      %v641 = vpack.c.bf16 %v635, %v635
      %v642 = vpack.c.bf16 %v636, %v636
      %v644 = vsel %vm406, %v640, 0
      %v647 = vsel %vm410, %v641, 0
      %v650 = vsel %vm410, %v642, 0
      %652 = vmatpush.bf16.msra.mxu0 0
      %653 = vmatpush.bf16.msra.mxu0 0
      %654 = vmatpush.bf16.msra.mxu0 0
      %655 = vmatpush.bf16.msra.mxu0 0
      %656 = vmatpush.bf16.msra.mxu0 0
      %657 = vmatpush.bf16.msra.mxu0 0
      %658 = vmatpush.bf16.msra.mxu0 0
      %659 = vmatpush.bf16.msra.mxu0 %v647
      %660 = vmatmul.bf16.gmra.mxu0 %v644
      %v661 = vpop.f32.mrf.mxu0
      %v662 = vadd.f32 0.0, %v661
      %v663 = vpop.f32.mrf.mxu0
      %664 = vdwg.mxu0
      %665 = vmatpush.bf16.msra.mxu0 0
      %666 = vmatpush.bf16.msra.mxu0 0
      %667 = vmatpush.bf16.msra.mxu0 0
      %668 = vmatpush.bf16.msra.mxu0 0
      %669 = vmatpush.bf16.msra.mxu0 0
      %670 = vmatpush.bf16.msra.mxu0 0
      %671 = vmatpush.bf16.msra.mxu0 0
      %672 = vmatpush.bf16.msra.mxu0 %v650
      %673 = vmatmul.bf16.gmra.mxu0 %v644
      %v674 = vpop.f32.mrf.mxu0
      %v675 = vadd.f32 0.0, %v674
      %v676 = vpop.f32.mrf.mxu0
      %677 = vdwg.mxu0
      %v679 = vsel %vm406, %v637, 0
      %v682 = vsel %vm410, %v638, 0
      %v685 = vsel %vm410, %v639, 0
      %687 = vmatpush.bf16.msra.mxu0 0
      %688 = vmatpush.bf16.msra.mxu0 0
      %689 = vmatpush.bf16.msra.mxu0 0
      %690 = vmatpush.bf16.msra.mxu0 0
      %691 = vmatpush.bf16.msra.mxu0 0
      %692 = vmatpush.bf16.msra.mxu0 0
      %693 = vmatpush.bf16.msra.mxu0 0
      %694 = vmatpush.bf16.msra.mxu0 %v682
      %695 = vmatmul.bf16.gmra.mxu0 %v679
      %v696 = vpop.f32.mrf.mxu0
      %v697 = vadd.f32 %v662, %v696
      %v698 = vpop.f32.mrf.mxu0
      %699 = vdwg.mxu0
      %700 = vmatpush.bf16.msra.mxu0 0
      %701 = vmatpush.bf16.msra.mxu0 0
      %702 = vmatpush.bf16.msra.mxu0 0
      %703 = vmatpush.bf16.msra.mxu0 0
      %704 = vmatpush.bf16.msra.mxu0 0
      %705 = vmatpush.bf16.msra.mxu0 0
      %706 = vmatpush.bf16.msra.mxu0 0
      %707 = vmatpush.bf16.msra.mxu0 %v685
      %708 = vmatmul.bf16.gmra.mxu0 %v679
      %v709 = vpop.f32.mrf.mxu0
      %v710 = vadd.f32 %v675, %v709
      %v711 = vpop.f32.mrf.mxu0
      %712 = vdwg.mxu0
      %v713 = vld [vmem:[%s8] sm:$0xf]
      %715 = vset.pattern.permute.xlu0 0
      %716 = vperm.xlu0 %715, %v713
      %v717 = vpop.permute.xlu0 %716
      %v719 = vadd.f32 %v697, %v717
      %v720 = vadd.f32 %v710, %v717
      %v721 = vmul.f32 %v719, %v446
      %v722 = vmul.f32 %v720, %v447
      %v723 = vmul.f32 %v719, %v453
      %v724 = vmul.f32 %v720, %v454
      %725 = vrot.lane.b32.xlu0 %v721, 1
      %v726 = vpop.permute.xlu0 %725
      %727 = vrot.lane.b32.xlu0 %v722, 1
      %v728 = vpop.permute.xlu0 %727
      %v729 = vsel %vm465, %v726, %v728
      %v730 = vsel %vm465, %v728, %v726
      %s731 = scalar_lea.vmem %s9, 12
      %v732 = vld [vmem:[%s731] sm:$0xf]
      %734 = vset.pattern.permute.xlu0 0
      %735 = vperm.xlu0 %734, %v732
      %v736 = vpop.permute.xlu0 %735
      %v738 = vmul.f32 %v736, %v730
      %v739 = vmul.f32 %v736, %v729
      %s740 = scalar_lea.vmem %s9, 16
      %v741 = vld [vmem:[%s740] sm:$0xf]
      %743 = vset.pattern.permute.xlu0 0
      %744 = vperm.xlu0 %743, %v741
      %v745 = vpop.permute.xlu0 %744
      %v747 = vmul.f32 %v745, %v719
      %v748 = vmul.f32 %v745, %v720
      %v749 = vadd.f32 %v738, %v747
      %v750 = vadd.f32 %v739, %v748
      %751 = vrot.lane.b32.xlu0 %v723, 127
      %v752 = vpop.permute.xlu0 %751
      %753 = vrot.lane.b32.xlu0 %v724, 127
      %v754 = vpop.permute.xlu0 %753
      %v755 = vsel %vm492, %v752, %v754
      %v756 = vsel %vm492, %v754, %v752
      %s757 = scalar_lea.vmem %s9, 20
      %v758 = vld [vmem:[%s757] sm:$0xf]
      %760 = vset.pattern.permute.xlu0 0
      %761 = vperm.xlu0 %760, %v758
      %v762 = vpop.permute.xlu0 %761
      %v764 = vmul.f32 %v762, %v755
      %v765 = vmul.f32 %v762, %v756
      %v766 = vadd.f32 %v749, %v764
      %v767 = vadd.f32 %v750, %v765
      %768 = vrot.lane.b32.xlu0 %v721, 17
      %v769 = vpop.permute.xlu0 %768
      %770 = vrot.lane.b32.xlu0 %v722, 17
      %v771 = vpop.permute.xlu0 %770
      %v772 = vsel %vm510, %v769, %v771
      %v773 = vsel %vm510, %v771, %v769
      %v774 = vld [vmem:[%s9] sm:$0xf]
      %776 = vset.pattern.permute.xlu0 0
      %777 = vperm.xlu0 %776, %v774
      %v778 = vpop.permute.xlu0 %777
      %v780 = vmul.f32 %v778, %v773
      %v781 = vmul.f32 %v778, %v772
      %782 = vrot.lane.b32.xlu0 %v719, 16
      %v783 = vpop.permute.xlu0 %782
      %784 = vrot.lane.b32.xlu0 %v720, 16
      %v785 = vpop.permute.xlu0 %784
      %v786 = vsel %vm525, %v783, %v785
      %v787 = vsel %vm525, %v785, %v783
      %s788 = scalar_lea.vmem %s9, 4
      %v789 = vld [vmem:[%s788] sm:$0xf]
      %791 = vset.pattern.permute.xlu0 0
      %792 = vperm.xlu0 %791, %v789
      %v793 = vpop.permute.xlu0 %792
      %v795 = vmul.f32 %v793, %v787
      %v796 = vmul.f32 %v793, %v786
      %v797 = vadd.f32 %v780, %v795
      %v798 = vadd.f32 %v781, %v796
      %799 = vrot.lane.b32.xlu0 %v723, 15
      %v800 = vpop.permute.xlu0 %799
      %801 = vrot.lane.b32.xlu0 %v724, 15
      %v802 = vpop.permute.xlu0 %801
      %v803 = vsel %vm543, %v800, %v802
      %v804 = vsel %vm543, %v802, %v800
      %s805 = scalar_lea.vmem %s9, 8
      %v806 = vld [vmem:[%s805] sm:$0xf]
      %808 = vset.pattern.permute.xlu0 0
      %809 = vperm.xlu0 %808, %v806
      %v810 = vpop.permute.xlu0 %809
      %v812 = vmul.f32 %v810, %v804
      %v813 = vmul.f32 %v810, %v803
      %v814 = vadd.f32 %v797, %v812
      %v815 = vadd.f32 %v798, %v813
      %v816 = vmul.f32 %v558, %v814
      %v817 = vmul.f32 %v559, %v815
      %v818 = vadd.f32 %v766, %v816
      %v819 = vadd.f32 %v767, %v817
      %820 = vrot.lane.b32.xlu0 %v721, 113
      %v821 = vpop.permute.xlu0 %820
      %822 = vrot.lane.b32.xlu0 %v722, 113
      %v823 = vpop.permute.xlu0 %822
      %v824 = vsel %vm570, %v821, %v823
      %v825 = vsel %vm570, %v823, %v821
      %s826 = scalar_lea.vmem %s9, 24
      %v827 = vld [vmem:[%s826] sm:$0xf]
      %829 = vset.pattern.permute.xlu0 0
      %830 = vperm.xlu0 %829, %v827
      %v831 = vpop.permute.xlu0 %830
      %v833 = vmul.f32 %v831, %v824
      %v834 = vmul.f32 %v831, %v825
      %835 = vrot.lane.b32.xlu0 %v719, 112
      %v836 = vpop.permute.xlu0 %835
      %837 = vrot.lane.b32.xlu0 %v720, 112
      %v838 = vpop.permute.xlu0 %837
      %v839 = vsel %vm586, %v836, %v838
      %v840 = vsel %vm586, %v838, %v836
      %s841 = scalar_lea.vmem %s9, 28
      %v842 = vld [vmem:[%s841] sm:$0xf]
      %844 = vset.pattern.permute.xlu0 0
      %845 = vperm.xlu0 %844, %v842
      %v846 = vpop.permute.xlu0 %845
      %v848 = vmul.f32 %v846, %v839
      %v849 = vmul.f32 %v846, %v840
      %v850 = vadd.f32 %v833, %v848
      %v851 = vadd.f32 %v834, %v849
      %852 = vrot.lane.b32.xlu0 %v723, 111
      %v853 = vpop.permute.xlu0 %852
      %854 = vrot.lane.b32.xlu0 %v724, 111
      %v855 = vpop.permute.xlu0 %854
      %v856 = vsel %vm604, %v853, %v855
      %v857 = vsel %vm604, %v855, %v853
      %s858 = scalar_lea.vmem %s9, 32
      %v859 = vld [vmem:[%s858] sm:$0xf]
      %861 = vset.pattern.permute.xlu0 0
      %862 = vperm.xlu0 %861, %v859
      %v863 = vpop.permute.xlu0 %862
      %v865 = vmul.f32 %v863, %v856
      %v866 = vmul.f32 %v863, %v857
      %v867 = vadd.f32 %v850, %v865
      %v868 = vadd.f32 %v851, %v866
      %v869 = vmul.f32 %v619, %v867
      %v870 = vmul.f32 %v620, %v868
      %v871 = vadd.f32 %v818, %v869
      %v872 = vadd.f32 %v819, %v870
      %v873 = vld [vmem:[%s10] sm:$0xf]
      %875 = vset.pattern.permute.xlu0 0
      %876 = vperm.xlu0 %875, %v873
      %v877 = vpop.permute.xlu0 %876
      %v879 = vadd.f32 %v871, %v877
      %v880 = vadd.f32 %v872, %v877
      %v883 = vrot.slane %v879, 4
      %v884 = vrot.slane %v880, 4
      %v887 = vsel %vm410, %v719, %v883
      %v888 = vsel %vm410, %v720, %v884
      %v889 = vadd.f32 %v887, %v388
      %v890 = vadd.f32 %v888, %v389
      %891 = vst [vmem:[%s386] sm:$0xff] %v889
      %892 = vst [vmem:[%s386 + $0x8] sm:$0xff] %v890
      %p893 = scmp.lt.s32.totalorder %s22, 1
      %s894 = scalar_select %p893, %s22, 1
      %s895 = smul.addr %s894, 2
      %s896 = smul.addr %s895, 8
      %s897 = scalar_lea.vmem %s11, %s896
      // Predicated region
      $region65: #{ghost_bottleneck_pallas.1} parent=63 // pred_check
        %p898 = pneg %p276
      $region66: #{ghost_bottleneck_pallas.1} parent=63 // pred_check_branch
        %900 = sbr.rel (%p898) target = $region68
      $region67: #{ghost_bottleneck_pallas.1} parent=63 // pred_region
        _
      $region68: #{ghost_bottleneck_pallas.1} parent=63 // pred_fallthru
        _
    $region64: #{ghost_bottleneck_pallas.1} parent=5 // pred_fallthru
      _
    %p901 = scmp.le.s32.totalorder 2, %s17
    // Predicated region
    $region69: #{ghost_bottleneck_pallas.1} parent=5 // pred_check
      %p902 = pneg %p901
    $region70: #{ghost_bottleneck_pallas.1} parent=5 // pred_check_branch
      %904 = sbr.rel (%p902) target = $region72
    $region71: #{ghost_bottleneck_pallas.1} parent=5 // pred_region
      %s905 = ssub.s32 %s17, 2
      // Predicated region
      $region73: #{ghost_bottleneck_pallas.1} parent=71 // pred_check
        %p906 = pneg %p282
      $region74: #{ghost_bottleneck_pallas.1} parent=71 // pred_check_branch
        %908 = sbr.rel (%p906) target = $region76
      $region75: #{ghost_bottleneck_pallas.1} parent=71 // pred_region
        %p909 = scmp.lt.s32.totalorder %s23, 1
        %s910 = scalar_select %p909, %s23, 1
        %s911 = smul.addr %s910, 2
        %s912 = smul.addr %s911, 8
        %s913 = scalar_lea.vmem %s11, %s912
      $region76: #{ghost_bottleneck_pallas.1} parent=71 // pred_fallthru
        _
    $region72: #{ghost_bottleneck_pallas.1} parent=5 // pred_fallthru
      _
  $region6: #{ghost_bottleneck_pallas.1} parent=0 // loop_footer
    %s21 = sadd.s32 1, %s17
  $region7: #{ghost_bottleneck_pallas.1} parent=0 // loop_footer_branch
    %16 = sbr.rel target = $region3
  $region8: #{ghost_bottleneck_pallas.1} parent=0 // loop_exit
    _

</llo_original>
